<compile_context>
chip_gen: v7x
topology: tpu7x:2x2x1
jax: 0.10.0
libtpu: 0.0.40
codegen_flags: <defaults>
</compile_context>

<pallas_src>
import functools

import jax
import jax.numpy as jnp
from jax.experimental import pallas as pl
from jax.experimental.pallas import tpu as pltpu

NUM_REWARD_BINS = 32          # MLPConfig.num_reward_bins

_FUSE_MAX_ELEMS = 512 * 1024  # <= 2 MiB of f32 -> fused single-pass path
_LANES = 1024                 # lane width for the large two-pass path
_TILE_ROWS = 512              # 512 x 1024 x 4 B = 2 MiB blocks
_MIN_TILE_ROWS = 64           # below this per-step overhead dominates -> pad path


def _round_up(n, m):
    return ((n + m - 1) // m) * m


def _largest_tile_rows(rows, max_rows=_TILE_ROWS):
    """Largest multiple of 8 that divides `rows` and is <= max_rows (rows % 8 == 0)."""
    cand = min(max_rows, rows)
    cand -= cand % 8
    while cand >= 8:
        if rows % cand == 0:
            return cand
        cand -= 8
    return 8


# ---------------------------------------------------------------------------
# Fused kernel: min/max update + binning in one VMEM-resident pass (small x)
# ---------------------------------------------------------------------------
def _fused_kernel(mm_ref, x_ref, out_ref, mm_out_ref, *, num_bins):
    x = x_ref[...]
    lo = jnp.minimum(mm_ref[0], jnp.min(x))
    hi = jnp.maximum(mm_ref[1], jnp.max(x))
    mm_out_ref[0] = lo
    mm_out_ref[1] = hi
    scale = num_bins / (hi - lo + 1e-4)          # one scalar divide, hoisted
    out_ref[...] = jnp.floor((x - lo) * scale).astype(jnp.int32)


# ---------------------------------------------------------------------------
# Kernel 1 (large path): running min/max update, reduction across row tiles.
# Each tile is reduced to two scalars (hidden under the tile DMA) and folded
# into a tiny SMEM accumulator; the SMEM output is written on the last step.
# ---------------------------------------------------------------------------
def _minmax_kernel(mm_ref, x_ref, mm_out_ref, acc_ref):
    i = pl.program_id(0)
    x = x_ref[...]
    tmin = jnp.min(x)
    tmax = jnp.max(x)

    @pl.when(i == 0)
    def _():
        acc_ref[0] = jnp.minimum(mm_ref[0], tmin)
        acc_ref[1] = jnp.maximum(mm_ref[1], tmax)

    @pl.when(i > 0)
    def _():
        acc_ref[0] = jnp.minimum(acc_ref[0], tmin)
        acc_ref[1] = jnp.maximum(acc_ref[1], tmax)

    @pl.when(i == pl.num_programs(0) - 1)
    def _():
        mm_out_ref[0] = acc_ref[0]
        mm_out_ref[1] = acc_ref[1]


# ---------------------------------------------------------------------------
# Kernel 2 (large path): elementwise binning with hoisted scalar scale
# ---------------------------------------------------------------------------
def _bin_kernel(mm_ref, x_ref, out_ref, *, num_bins):
    lo = mm_ref[0]
    hi = mm_ref[1]
    scale = num_bins / (hi - lo + 1e-4)          # scalar, once per grid step
    out_ref[...] = jnp.floor((x_ref[...] - lo) * scale).astype(jnp.int32)


# ---------------------------------------------------------------------------
# Wrapper
# ---------------------------------------------------------------------------
def binner_forward(x, running_min_max, *, num_bins=NUM_REWARD_BINS,
                   force_two_pass=False):
    """Returns (binned int32 with x.shape, new_running_min_max (2,) f32)."""
    orig_shape = x.shape
    flat = x.astype(jnp.float32).reshape(-1)
    n = flat.shape[0]
    running_min_max = running_min_max.astype(jnp.float32)

    if n <= _FUSE_MAX_ELEMS and not force_two_pass:
        # ------- fused single-pass path (x fits comfortably in VMEM) -------
        if n % (8 * 128) == 0:
            rows, lanes = 8, n // 8                       # free bitcast reshape
            x2 = flat.reshape(rows, lanes)
            padded = False
        else:
            n_pad = _round_up(n, 8 * 128)
            xp = jnp.pad(flat, (0, n_pad - n), mode="edge")   # min/max neutral
            rows, lanes = 8, n_pad // 8
            x2 = xp.reshape(rows, lanes)
            padded = True

        binned2, new_mm = pl.pallas_call(
            functools.partial(_fused_kernel, num_bins=num_bins),
            out_shape=(jax.ShapeDtypeStruct((rows, lanes), jnp.int32),
                       jax.ShapeDtypeStruct((2,), jnp.float32)),
            grid=(1,),
            in_specs=[
                pl.BlockSpec(memory_space=pltpu.SMEM),           # running min/max
                pl.BlockSpec((rows, lanes), lambda i: (0, 0)),   # x
            ],
            out_specs=(
                pl.BlockSpec((rows, lanes), lambda i: (0, 0)),   # binned
                pl.BlockSpec(memory_space=pltpu.SMEM),           # new min/max
            ),
            compiler_params=pltpu.CompilerParams(
                dimension_semantics=("arbitrary",)),
        )(running_min_max, x2)

        if padded:
            binned = binned2.reshape(-1)[:n].reshape(orig_shape)
        else:
            binned = binned2.reshape(orig_shape)
        return binned, new_mm

    # ------- large path: two passes over ~2 MiB lane-dense blocks -------
    padded = True
    if n % (_LANES * 8) == 0:
        rows = n // _LANES
        tile_rows = _largest_tile_rows(rows)
        if tile_rows >= _MIN_TILE_ROWS:
            # Copy-free path: no pad, no output slice.
            rows_p = rows
            x2 = flat.reshape(rows_p, _LANES)
            padded = False

    if padded:
        rows = _round_up((n + _LANES - 1) // _LANES, 8)
        tile_rows = min(_TILE_ROWS, rows)
        rows_p = _round_up(rows, tile_rows)
        n_pad = rows_p * _LANES
        xp = jnp.pad(flat, (0, n_pad - n), mode="edge")   # neutral for min/max
        x2 = xp.reshape(rows_p, _LANES)

    grid = (rows_p // tile_rows,)

    new_mm = pl.pallas_call(
        _minmax_kernel,
        out_shape=jax.ShapeDtypeStruct((2,), jnp.float32),
        grid=grid,
        in_specs=[
            pl.BlockSpec(memory_space=pltpu.SMEM),                  # running min/max
            pl.BlockSpec((tile_rows, _LANES), lambda i: (i, 0)),    # x tile
        ],
        out_specs=pl.BlockSpec(memory_space=pltpu.SMEM),            # new min/max
        scratch_shapes=[
            pltpu.SMEM((2,), jnp.float32),                          # running scalar acc
        ],
        compiler_params=pltpu.CompilerParams(
            dimension_semantics=("arbitrary",)),
    )(running_min_max, x2)

    binned2 = pl.pallas_call(
        functools.partial(_bin_kernel, num_bins=num_bins),
        out_shape=jax.ShapeDtypeStruct((rows_p, _LANES), jnp.int32),
        grid=grid,
        in_specs=[
            pl.BlockSpec(memory_space=pltpu.SMEM),                  # new min/max
            pl.BlockSpec((tile_rows, _LANES), lambda i: (i, 0)),    # x tile
        ],
        out_specs=pl.BlockSpec((tile_rows, _LANES), lambda i: (i, 0)),
        compiler_params=pltpu.CompilerParams(
            dimension_semantics=("parallel",)),
    )(new_mm, x2)

    if padded:
        binned = binned2.reshape(-1)[:n].reshape(orig_shape)
    else:
        binned = binned2.reshape(orig_shape)
    return binned, new_mm


# ---------------------------------------------------------------------------
# Pure-JAX reference (same hoisted-scale formulation as the kernels)
# ---------------------------------------------------------------------------
def binner_ref(x, running_min_max, num_bins=NUM_REWARD_BINS):
    xf = x.astype(jnp.float32)
    lo = jnp.minimum(running_min_max[0], jnp.min(xf))
    hi = jnp.maximum(running_min_max[1], jnp.max(xf))
    scale = num_bins / (hi - lo + 1e-4)
    out = jnp.floor((xf - lo) * scale).astype(jnp.int32)
    return out, jnp.stack([lo, hi])


if __name__ == "__main__":
    key = jax.random.PRNGKey(0)
    k1, k2, k3, k4, k5 = jax.random.split(key, 5)
    running_min_max = jnp.array([0.0, 1.0], dtype=jnp.float32)  # buffer init

    def check(x, mm, **kw):
        b, new_mm = binner_forward(x, mm, **kw)
        b = jax.block_until_ready(b)
        new_mm = jax.block_until_ready(new_mm)
        rb, rmm = binner_ref(x, mm)
        assert jnp.allclose(new_mm, rmm, rtol=1e-6, atol=1e-6), (new_mm, rmm)
        assert jnp.array_equal(b, rb)
        assert b.shape == x.shape and b.dtype == jnp.int32
        return b, new_mm

    # 1) typical reward vector (batch_size=256) -> fused path, ragged size
    x1 = jax.random.uniform(k1, (256,), jnp.float32, minval=-2.0, maxval=3.0)
    check(x1, running_min_max)

    # 2) 2-D tensor with a non-multiple-of-128 trailing dim -> fused, padded
    x2 = jax.random.uniform(k2, (16, 300), jnp.float32, minval=-1.0, maxval=0.5)
    check(x2, running_min_max)

    # 3) nicely shaped small tensor -> fused, copy-free (no pad / no slice)
    x3 = jax.random.uniform(k3, (8, 1024), jnp.float32, minval=-0.5, maxval=2.0)
    check(x3, running_min_max)

    # 4) two-pass pipeline, ragged size -> padded large path (forced)
    x4 = jax.random.uniform(k4, (1200, 700), jnp.float32, minval=-3.0, maxval=4.0)
    check(x4, running_min_max, force_two_pass=True)

    # 5) two-pass pipeline, tileable size -> copy-free large path (forced)
    x5 = jax.random.uniform(k5, (1024, 1024), jnp.float32, minval=-1.5, maxval=2.5)
    check(x5, running_min_max, force_two_pass=True)

    print("KERNEL_OK")
</pallas_src>

<mosaic_0001>
module attributes {stable_mosaic.version = 11 : i64} {
  func.func @_fused_kernel(%arg0: i32, %arg1: memref<2xf32, #tpu.memory_space<smem>>, %arg2: memref<8x128xf32, #tpu.memory_space<vmem>>, %arg3: memref<8x128xi32, #tpu.memory_space<vmem>>, %arg4: memref<2xf32, #tpu.memory_space<smem>>) attributes {dimension_semantics = [#tpu.dimension_semantics<arbitrary>], iteration_bounds = array<i64: 1>, scalar_prefetch = 0 : i64, scratch_operands = 0 : i64, tpu.core_type = #tpu.core_type<tc>, window_params = [{transform_indices = @transform_0, window_bounds = array<i64: 2>}, {pipeline_mode = #tpu.pipeline_mode<synchronous>, transform_indices = @transform_1, window_bounds = array<i64: 8, 128>}, {pipeline_mode = #tpu.pipeline_mode<synchronous>, transform_indices = @transform_2, window_bounds = array<i64: 8, 128>}, {transform_indices = @transform_3, window_bounds = array<i64: 2>}]} {
    %c0 = arith.constant 0 : index
    %c0_0 = arith.constant 0 : index
    %0 = vector.load %arg2[%c0, %c0_0] : memref<8x128xf32, #tpu.memory_space<vmem>>, vector<8x128xf32>
    %c0_1 = arith.constant 0 : index
    %1 = memref.load %arg1[%c0_1] : memref<2xf32, #tpu.memory_space<smem>>
    %2 = vector.shape_cast %0 : vector<8x128xf32> to vector<1x8x128xf32>
    %cst = arith.constant dense<0x7F800000> : vector<1xf32>
    %3 = vector.multi_reduction <minimumf>, %2, %cst [1, 2] : vector<1x8x128xf32> to vector<1xf32>
    %4 = vector.shape_cast %3 : vector<1xf32> to vector<1x1x1xf32>
    %5 = vector.extract %4[0, 0, 0] : f32 from vector<1x1x1xf32>
    %6 = arith.minimumf %1, %5 : f32
    %c1 = arith.constant 1 : index
    %7 = memref.load %arg1[%c1] : memref<2xf32, #tpu.memory_space<smem>>
    %8 = vector.shape_cast %0 : vector<8x128xf32> to vector<1x8x128xf32>
    %cst_2 = arith.constant dense<0xFF800000> : vector<1xf32>
    %9 = vector.multi_reduction <maximumf>, %8, %cst_2 [1, 2] : vector<1x8x128xf32> to vector<1xf32>
    %10 = vector.shape_cast %9 : vector<1xf32> to vector<1x1x1xf32>
    %11 = vector.extract %10[0, 0, 0] : f32 from vector<1x1x1xf32>
    %12 = arith.maximumf %7, %11 : f32
    %c0_3 = arith.constant 0 : index
    %13 = memref.load %arg4[%c0_3] : memref<2xf32, #tpu.memory_space<smem>>
    memref.store %6, %arg4[%c0_3] : memref<2xf32, #tpu.memory_space<smem>>
    %c1_4 = arith.constant 1 : index
    %14 = memref.load %arg4[%c1_4] : memref<2xf32, #tpu.memory_space<smem>>
    memref.store %12, %arg4[%c1_4] : memref<2xf32, #tpu.memory_space<smem>>
    %15 = arith.subf %12, %6 : f32
    %cst_5 = arith.constant 9.99999974E-5 : f32
    %16 = arith.addf %15, %cst_5 : f32
    %cst_6 = arith.constant 3.200000e+01 : f32
    %17 = arith.divf %cst_6, %16 : f32
    %18 = vector.broadcast %6 : f32 to vector<8x128xf32>
    %19 = arith.subf %0, %18 : vector<8x128xf32>
    %20 = vector.broadcast %17 : f32 to vector<8x128xf32>
    %21 = arith.mulf %19, %20 : vector<8x128xf32>
    %22 = math.floor %21 : vector<8x128xf32>
    %23 = arith.fptosi %22 : vector<8x128xf32> to vector<8x128xi32>
    %c0_7 = arith.constant 0 : index
    %c0_8 = arith.constant 0 : index
    %24 = vector.load %arg3[%c0_7, %c0_8] : memref<8x128xi32, #tpu.memory_space<vmem>>, vector<8x128xi32>
    tpu.vector_store %arg3[%c0_7, %c0_8], %23 {strides = array<i32>} : memref<8x128xi32, #tpu.memory_space<vmem>>, vector<8x128xi32>,
    return
  }
  func.func @transform_0(%arg0: i32) -> i32 {
    %c0_i32 = arith.constant 0 : i32
    %c0_i32_0 = arith.constant 0 : i32
    return %c0_i32 : i32
  }
  func.func @transform_1(%arg0: i32) -> (i32, i32) {
    %c0_i32 = arith.constant 0 : i32
    %c0_i32_0 = arith.constant 0 : i32
    %c0_i32_1 = arith.constant 0 : i32
    return %c0_i32, %c0_i32_0 : i32, i32
  }
  func.func @transform_2(%arg0: i32) -> (i32, i32) {
    %c0_i32 = arith.constant 0 : i32
    %c0_i32_0 = arith.constant 0 : i32
    %c0_i32_1 = arith.constant 0 : i32
    return %c0_i32, %c0_i32_0 : i32, i32
  }
  func.func @transform_3(%arg0: i32) -> i32 {
    %c0_i32 = arith.constant 0 : i32
    %c0_i32_0 = arith.constant 0 : i32
    return %c0_i32 : i32
  }
}

</mosaic_0001>

<llo_original>
// kernel: tpu_custom_call.1
$region0: #{tpu_custom_call.1}
  #allocation0 [shape = 'u32[]', space=smem, size = 0x4, offset = 0x4, fixed_abs, tag = 'smem constant byte address 0x4 - core index']
  #allocation1 [shape = 'u32[144,128]{1,0:T(1,128)}', space=vmem, size = 0x12000, scoped, tag = 'internal scratch']
  %s0 = inlined_call_operand.hbm [shape: f32[2], index: 0, kind: input, shape index: {}]
  %s1 = inlined_call_operand.hbm [shape: f32[8,128], index: 1, kind: input, shape index: {}]
  %s2 = inlined_call_operand.hbm [shape: s32[8,128], index: 2, kind: output, shape index: {0}]
  %s3 = inlined_call_operand.hbm [shape: f32[2], index: 3, kind: output, shape index: {1}]
  %4 = xla_tuple %s2, %s3
  %s5 = sld [smem:[#allocation0]]
  $region34: #{tpu_custom_call.1} parent=0
    _
  %s7 = ssub.s32 1, %s5
  %s8 = scalar_select 0, %s7, %s5
  $region1: #{tpu_custom_call.1} parent=0
    #allocation2 [shape = 'u8[512]{0}', space=smem, size = 0x200, scoped, tag = 'input window, operand 0, single buffered']
    #allocation3 [shape = 's32[1]{0}', space=sflag, size = 0x4, scoped, tag = 'scoped memory for tpu_custom_call.1']
    #allocation4 [shape = 's32[1]{0}', space=sflag, size = 0x4, scoped, tag = 'scoped memory for tpu_custom_call.1']
    #allocation5 [shape = 's32[1]{0}', space=sflag, size = 0x4, scoped, tag = 'scoped memory for tpu_custom_call.1']
    #allocation6 [shape = 's32[1]{0}', space=sflag, size = 0x4, scoped, tag = 'scoped memory for tpu_custom_call.1']
    #allocation7 [shape = 'u8[4096]{0}', space=vmem, size = 0x1000, scoped, tag = 'input window, operand 1, single buffered']
    #allocation8 [shape = 'u8[4096]{0}', space=vmem, size = 0x1000, scoped, tag = 'output window, operand 0, single buffered']
    #allocation9 [shape = 'u8[512]{0}', space=smem, size = 0x200, scoped, tag = 'output window, operand 1, single buffered']
    %9 = vsyncpa [#allocation5], 0
    %10 = vsyncpa [#allocation3], 0
    %11 = vsyncpa [#allocation4], 0
    %12 = vsyncpa [#allocation6], 0
    // Predicated region
    $region2: #{tpu_custom_call.1} parent=1 // pred_check
      _
    $region3: #{tpu_custom_call.1} parent=1 // pred_check_branch
      %14 = sbr.rel (0) target = $region5
    $region4: #{tpu_custom_call.1} parent=1 // pred_region
      %s16 = ssub.s32 16, 16
      %17 = vsyncadd [#allocation5], %s16
      %20 = dma.hbm_to_smem %s0, 16, [#allocation2], [#allocation5]
    $region5: #{tpu_custom_call.1} parent=1 // pred_fallthru
      _
    // Predicated region
    $region6: #{tpu_custom_call.1} parent=1 // pred_check
      _
    $region7: #{tpu_custom_call.1} parent=1 // pred_check_branch
      %22 = sbr.rel (0) target = $region9
    $region8: #{tpu_custom_call.1} parent=1 // pred_region
      %s24 = ssub.s32 128, 128
      %25 = vsyncadd [#allocation3], %s24
      %s27 = sshll.u32 [#allocation7], 4
      %s28 = int_to_ptr.vmem [resolvable:$true] %s27
      %30 = dma.hbm_to_vmem [thread:$0]  %s1, 128, %s28, [#allocation3]
    $region9: #{tpu_custom_call.1} parent=1 // pred_fallthru
      _
    // Predicated region
    $region10: #{tpu_custom_call.1} parent=1 // pred_check
      _
    $region11: #{tpu_custom_call.1} parent=1 // pred_check_branch
      %32 = sbr.rel (0) target = $region13
    $region12: #{tpu_custom_call.1} parent=1 // pred_region
      %33 = dma.done [#allocation5], 16
    $region13: #{tpu_custom_call.1} parent=1 // pred_fallthru
      _
    // Predicated region
    $region14: #{tpu_custom_call.1} parent=1 // pred_check
      _
    $region15: #{tpu_custom_call.1} parent=1 // pred_check_branch
      %35 = sbr.rel (0) target = $region17
    $region16: #{tpu_custom_call.1} parent=1 // pred_region
      %36 = dma.done [#allocation3], 128
    $region17: #{tpu_custom_call.1} parent=1 // pred_fallthru
      _
    %37 = sfence
    %v38 = vld [vmem:[#allocation7] sm:$0xff]
    %s39 = sld [smem:[#allocation2]]
    %40 = vmin.xlane.f32.xlu0 %v38
    %v41 = vpop.xlane.xlu0 %40
    %v42 = vrot.slane %v41, 4
    %v43 = vmin.f32 %v41, %v42
    %v44 = vrot.slane %v43, 2
    %v45 = vmin.f32 %v43, %v44
    %v46 = vrot.slane %v45, 1
    %v47 = vmin.f32 %v45, %v46
    %s48 = vtos %v47
    %s49 = smin.f32 %s39, %s48
    %s50 = sld [smem:[#allocation2 + $0x1]]
    %51 = vmax.xlane.f32.xlu0 %v38
    %v52 = vpop.xlane.xlu0 %51
    %v53 = vrot.slane %v52, 4
    %v54 = vmax.f32 %v52, %v53
    %v55 = vrot.slane %v54, 2
    %v56 = vmax.f32 %v54, %v55
    %v57 = vrot.slane %v56, 1
    %v58 = vmax.f32 %v56, %v57
    %s59 = vtos %v58
    %s60 = smax.f32 %s50, %s59
    %s61 = scalar_lea.smem [#allocation9], 0
    %62 = sst [smem:[%s61]] %s49
    %s63 = scalar_lea.smem [#allocation9], 1
    %64 = sst [smem:[%s63]] %s60
    %s65 = ssub.f32 %s60, %s49
    %s66 = sadd.f32 %s65, 0.0001
    %v67 = vstv %s66
    %v68 = vrcp.pop %v67
    %s69 = vtos %v68
    %s70 = smul.f32 32.0, %s69
    %v71 = vstv %s49
    %v72 = vsub.f32 %v38, %v71
    %v73 = vstv %s70
    %v74 = vmul.f32 %v72, %v73
    %v75 = vfloor.f32 %v74
    %v76 = vcvt.f32.s32.to.zero.pseudo %v75
    %77 = vst [vmem:[#allocation8] sm:$0xff] %v76
    // Predicated region
    $region18: #{tpu_custom_call.1} parent=1 // pred_check
      _
    $region19: #{tpu_custom_call.1} parent=1 // pred_check_branch
      %79 = sbr.rel (0) target = $region21
    $region20: #{tpu_custom_call.1} parent=1 // pred_region
      %s81 = ssub.s32 128, 128
      %82 = vsyncadd [#allocation4], %s81
      %s84 = sshll.u32 [#allocation8], 4
      %s85 = int_to_ptr.vmem [resolvable:$true] %s84
      %87 = dma.vmem_to_hbm [thread:$0]  %s85, 128, %s2, [#allocation4]
    $region21: #{tpu_custom_call.1} parent=1 // pred_fallthru
      _
    // Predicated region
    $region22: #{tpu_custom_call.1} parent=1 // pred_check
      _
    $region23: #{tpu_custom_call.1} parent=1 // pred_check_branch
      %89 = sbr.rel (0) target = $region25
    $region24: #{tpu_custom_call.1} parent=1 // pred_region
      %s91 = ssub.s32 16, 16
      %92 = vsyncadd [#allocation6], %s91
      %95 = dma.smem_to_hbm [#allocation9], 16, %s3, [#allocation6]
    $region25: #{tpu_custom_call.1} parent=1 // pred_fallthru
      _
    // Predicated region
    $region26: #{tpu_custom_call.1} parent=1 // pred_check
      _
    $region27: #{tpu_custom_call.1} parent=1 // pred_check_branch
      %97 = sbr.rel (0) target = $region29
    $region28: #{tpu_custom_call.1} parent=1 // pred_region
      %98 = dma.done [#allocation4], 128
    $region29: #{tpu_custom_call.1} parent=1 // pred_fallthru
      _
    // Predicated region
    $region30: #{tpu_custom_call.1} parent=1 // pred_check
      _
    $region31: #{tpu_custom_call.1} parent=1 // pred_check_branch
      %100 = sbr.rel (0) target = $region33
    $region32: #{tpu_custom_call.1} parent=1 // pred_region
      %101 = dma.done [#allocation6], 16
    $region33: #{tpu_custom_call.1} parent=1 // pred_fallthru
      _
    %102 = sfence
    %103 = vsyncpa [#allocation3], 1
    %104 = vsyncpa [#allocation4], 1
    %105 = vsyncpa [#allocation5], 1
    %106 = vsyncpa [#allocation6], 1

</llo_original>
